<compile_context>
chip_gen: v5e
topology: v5e:2x2
jax: 0.10.0
libtpu: 0.0.40
codegen_flags: <defaults>
</compile_context>

<pallas_src>
import math

import jax
import jax.numpy as jnp
from jax.experimental import pallas as pl
from jax.experimental.pallas import tpu as pltpu


def _cse_kernel(x_ref, w1t_ref, b1_ref, w2t_ref, b2_ref, o_ref):
    # x_ref : (bblk*C, HW) block, native dtype.
    # w1t   : (C, R) f32     b1 : (1, R) f32
    # w2t   : (R, R) f32     b2 : (1, R) f32
    # o_ref : (1, R, bblk) f32 block (batch on lanes -> unmasked store).
    rows, hw = x_ref.shape
    cin, red = w1t_ref.shape
    bblk = rows // cin
    inv_hw = 1.0 / hw

    x = x_ref[...]
    # Global average pool: cross-lane sum (XLU) with f32 accumulation, done on
    # the sublane-dense 2-D tile (no padded 3-D relayout of the big slab).
    s = jnp.sum(x.astype(jnp.float32), axis=-1)          # (bblk*C,)
    m = s.reshape(bblk, cin) * inv_hw                    # (bblk, C)

    # conv1 (1x1, C->R) + bn1 folded + ReLU.
    h = jnp.maximum(
        jnp.dot(m, w1t_ref[...], preferred_element_type=jnp.float32)
        + b1_ref[...],
        0.0,
    )                                                    # (bblk, R)

    # conv2 (1x1, R->R) + bn2 folded + sigmoid.
    y = jax.nn.sigmoid(
        jnp.dot(h, w2t_ref[...], preferred_element_type=jnp.float32)
        + b2_ref[...]
    )                                                    # (bblk, R)

    # Lane-dense store: R on sublanes, bblk on lanes.
    o_ref[0] = y.T                                       # (R, bblk)


def _choose_bblk(B, C, HW, itemsize):
    """Pick the per-grid-step batch block.

    Returns (bblk, nblk, needs_pad).  bblk*C is kept a multiple of 8 (sublane
    alignment of the (bblk*C, HW) block) unless a single block covers the whole
    array; tiles target ~4 MiB so the (double-buffered) pipeline stays under
    v5e's 16 MiB scoped-VMEM default and v7x's tighter physical VMEM, while
    amortizing the per-step pipeline overhead.
    """
    align = 8 // math.gcd(C, 8)            # smallest bblk with bblk*C % 8 == 0
    row_bytes = max(C * HW * itemsize, 1)  # bytes of one image in the 2-D slab
    target_bytes = 4 * 1024 * 1024
    cap = max(align, (target_bytes // row_bytes) // align * align)

    if B <= cap:
        # Whole batch fits in one tile.  Prefer two grid steps (v7x megacore)
        # only if each half is still a multi-MiB, aligned tile.
        half = B // 2
        if B % 2 == 0 and half % align == 0 and half * row_bytes >= 2 * 1024 * 1024:
            return half, 2, False
        # Single block == full array: no alignment constraint, no padding.
        return B, 1, False

    # Largest aligned divisor of B not exceeding the VMEM cap -> no pad copy.
    for cand in range(cap, 0, -1):
        if cand % align == 0 and B % cand == 0:
            return cand, B // cand, False

    # Fallback: ragged tail, requires a pad copy in the wrapper.
    return cap, pl.cdiv(B, cap), True


def cse_pallas(x_nchw, kernel_params):
    """x_nchw: (B, C, H, W).  Returns (B, C//2, 1, 1) float32."""
    B, C, H, W = x_nchw.shape
    w1t, b1, w2t, b2 = kernel_params     # (C,R), (1,R), (R,R), (1,R) f32
    R = w1t.shape[1]
    HW = H * W
    itemsize = jnp.dtype(x_nchw.dtype).itemsize

    bblk, nblk, needs_pad = _choose_bblk(B, C, HW, itemsize)
    Bp = nblk * bblk

    # Free, contiguous reshape; input stays in its native dtype (no extra
    # full-HBM upcast pass — the kernel accumulates the pool sum in f32).
    x2 = x_nchw.reshape(B * C, HW)
    if needs_pad:
        # TODO(synk): ragged tail handled by a pad copy (extra HBM pass); only
        # hit when B has no VMEM-sized aligned divisor.
        x2 = jnp.pad(x2, ((0, (Bp - B) * C), (0, 0)))

    out = pl.pallas_call(
        _cse_kernel,
        out_shape=jax.ShapeDtypeStruct((nblk, R, bblk), jnp.float32),
        grid=(nblk,),
        in_specs=[
            pl.BlockSpec((bblk * C, HW), lambda i: (i, 0)),   # x slab
            pl.BlockSpec(w1t.shape, lambda i: (0, 0)),        # w1^T (VMEM)
            pl.BlockSpec(b1.shape, lambda i: (0, 0)),         # b1
            pl.BlockSpec(w2t.shape, lambda i: (0, 0)),        # w2^T (VMEM)
            pl.BlockSpec(b2.shape, lambda i: (0, 0)),         # b2
        ],
        out_specs=pl.BlockSpec((1, R, bblk), lambda i: (i, 0, 0)),
        compiler_params=pltpu.CompilerParams(
            dimension_semantics=("parallel",),
        ),
        cost_estimate=pl.CostEstimate(
            flops=int(Bp * C * HW + 2 * Bp * C * R + 2 * Bp * R * R),
            transcendentals=int(Bp * R),
            bytes_accessed=int(Bp * C * HW * itemsize + Bp * R * 4),
        ),
    )(x2, w1t, b1, w2t, b2)

    # (nblk, R, bblk) -> (B, R, 1, 1); tiny relayout on a (Bp, R)-sized array.
    out = out.transpose(0, 2, 1).reshape(Bp, R)[:B]
    return out.reshape(B, R, 1, 1)


def init_params(key, C, eps=1e-5):
    """Deterministic synthetic conv + BN params with eval-mode BN folded in.

    Returns (dense_params, kernel_params):
      dense layout : (w_eff (Cout, Cin), b_eff (Cout,)) per 1x1 conv
      kernel layout: (w1^T (C, R), b1 (1, R), w2^T (R, R), b2 (1, R)) f32
    """
    R = C // 2
    k1, k2 = jax.random.split(key)

    def conv_bn(k_, cout, cin):
        kws, kbs, kg, kbeta, km, kv = jax.random.split(k_, 6)
        w = 0.3 * jax.random.normal(kws, (cout, cin), jnp.float32)
        b = 0.05 * jax.random.normal(kbs, (cout,), jnp.float32)
        gamma = 1.0 + 0.1 * jax.random.normal(kg, (cout,), jnp.float32)
        beta = 0.05 * jax.random.normal(kbeta, (cout,), jnp.float32)
        mean = 0.1 * jax.random.normal(km, (cout,), jnp.float32)
        var = 0.8 + 0.4 * jax.random.uniform(kv, (cout,), jnp.float32)
        scale = gamma / jnp.sqrt(var + eps)
        w_eff = w * scale[:, None]
        b_eff = (b - mean) * scale + beta
        return w_eff, b_eff

    w1, b1 = conv_bn(k1, R, C)   # conv1 (1x1, C->R) + bn1
    w2, b2 = conv_bn(k2, R, R)   # conv2 (1x1, R->R) + bn2

    dense_params = [(w1, b1), (w2, b2)]
    kernel_params = (
        jnp.asarray(w1.T, jnp.float32),
        b1.reshape(1, -1).astype(jnp.float32),
        jnp.asarray(w2.T, jnp.float32),
        b2.reshape(1, -1).astype(jnp.float32),
    )
    return dense_params, kernel_params


def cse_reference(x, dense_params):
    """Pure-JAX reference (BN already folded into the 1x1 conv params)."""
    (w1, b1), (w2, b2) = dense_params
    B = x.shape[0]
    avg = jnp.mean(x.astype(jnp.float32), axis=(2, 3))   # AvgPool2d -> (B, C)
    h = jax.nn.relu(avg @ w1.T + b1)                     # conv1 + bn1 + relu
    out = jax.nn.sigmoid(h @ w2.T + b2)                  # conv2 + bn2 + sigmoid
    return out.reshape(B, -1, 1, 1)


if __name__ == "__main__":
    # TODO(synk): BatchNorm training-mode running-stat updates are not modeled;
    # eval-mode BN is folded into the conv weights (standard inference fusion).
    key = jax.random.PRNGKey(0)
    kx, kp = jax.random.split(key)
    B, C, H, W = 2, 4, 16, 16

    x = jax.random.normal(kx, (B, C, H, W), jnp.float32)
    dense_params, kernel_params = init_params(kp, C)

    out = cse_pallas(x, kernel_params)
    out = jax.block_until_ready(out)

    ref = cse_reference(x, dense_params)
    assert out.shape == (B, C // 2, 1, 1), out.shape
    max_err = float(jnp.max(jnp.abs(out - ref)))
    assert max_err < 1e-5, f"mismatch vs reference: {max_err}"

    print("KERNEL_OK")
</pallas_src>

<mosaic_0001>
module attributes {stable_mosaic.version = 11 : i64} {
  func.func @_cse_kernel(%arg0: i32, %arg1: memref<8x256xf32, #tpu.memory_space<vmem>>, %arg2: memref<4x2xf32, #tpu.memory_space<vmem>>, %arg3: memref<1x2xf32, #tpu.memory_space<vmem>>, %arg4: memref<2x2xf32, #tpu.memory_space<vmem>>, %arg5: memref<1x2xf32, #tpu.memory_space<vmem>>, %arg6: memref<1x2x2xf32, #tpu.memory_space<vmem>>) attributes {dimension_semantics = [#tpu.dimension_semantics<parallel>], iteration_bounds = array<i64: 1>, scalar_prefetch = 0 : i64, scratch_operands = 0 : i64, tpu.core_type = #tpu.core_type<tc>, window_params = [{transform_indices = @transform_0, window_bounds = array<i64: 8, 256>}, {pipeline_mode = #tpu.pipeline_mode<synchronous>, transform_indices = @transform_1, window_bounds = array<i64: 4, 2>}, {pipeline_mode = #tpu.pipeline_mode<synchronous>, transform_indices = @transform_2, window_bounds = array<i64: 1, 2>}, {pipeline_mode = #tpu.pipeline_mode<synchronous>, transform_indices = @transform_3, window_bounds = array<i64: 2, 2>}, {pipeline_mode = #tpu.pipeline_mode<synchronous>, transform_indices = @transform_4, window_bounds = array<i64: 1, 2>}, {transform_indices = @transform_5, window_bounds = array<i64: 1, 2, 2>}]} {
    %c0 = arith.constant 0 : index
    %c0_0 = arith.constant 0 : index
    %0 = vector.load %arg1[%c0, %c0_0] : memref<8x256xf32, #tpu.memory_space<vmem>>, vector<8x256xf32>
    %cst = arith.constant dense<0.000000e+00> : vector<8xf32>
    %1 = vector.multi_reduction <add>, %0, %cst [1] : vector<8x256xf32> to vector<8xf32>
    %2 = vector.shape_cast %1 : vector<8xf32> to vector<2x4xf32>
    %cst_1 = arith.constant 3.906250e-03 : f32
    %3 = vector.broadcast %cst_1 : f32 to vector<2x4xf32>
    %4 = arith.mulf %2, %3 : vector<2x4xf32>
    %c0_2 = arith.constant 0 : index
    %c0_3 = arith.constant 0 : index
    %5 = vector.load %arg2[%c0_2, %c0_3] : memref<4x2xf32, #tpu.memory_space<vmem>>, vector<4x2xf32>
    %cst_4 = arith.constant dense<0.000000e+00> : vector<2x2xf32>
    %6 = tpu.matmul %4, %5, %cst_4 {dimension_numbers = #tpu.dot_dimension_numbers<[1], [0], [0], [1], [0, 0, 1, 1], [], []>} : vector<2x4xf32>, vector<4x2xf32>, vector<2x2xf32> -> vector<2x2xf32>
    %c0_5 = arith.constant 0 : index
    %c0_6 = arith.constant 0 : index
    %7 = vector.load %arg3[%c0_5, %c0_6] : memref<1x2xf32, #tpu.memory_space<vmem>>, vector<1x2xf32>
    %8 = vector.broadcast %7 : vector<1x2xf32> to vector<2x2xf32>
    %9 = arith.addf %6, %8 : vector<2x2xf32>
    %cst_7 = arith.constant 0.000000e+00 : f32
    %10 = vector.broadcast %cst_7 : f32 to vector<2x2xf32>
    %11 = arith.maximumf %9, %10 : vector<2x2xf32>
    %c0_8 = arith.constant 0 : index
    %c0_9 = arith.constant 0 : index
    %12 = vector.load %arg4[%c0_8, %c0_9] : memref<2x2xf32, #tpu.memory_space<vmem>>, vector<2x2xf32>
    %cst_10 = arith.constant dense<0.000000e+00> : vector<2x2xf32>
    %13 = tpu.matmul %11, %12, %cst_10 {dimension_numbers = #tpu.dot_dimension_numbers<[1], [0], [0], [1], [0, 0, 1, 1], [], []>} : vector<2x2xf32>, vector<2x2xf32>, vector<2x2xf32> -> vector<2x2xf32>
    %c0_11 = arith.constant 0 : index
    %c0_12 = arith.constant 0 : index
    %14 = vector.load %arg5[%c0_11, %c0_12] : memref<1x2xf32, #tpu.memory_space<vmem>>, vector<1x2xf32>
    %15 = vector.broadcast %14 : vector<1x2xf32> to vector<2x2xf32>
    %16 = arith.addf %13, %15 : vector<2x2xf32>
    %17 = arith.negf %16 : vector<2x2xf32>
    %18 = math.exp %17 : vector<2x2xf32>
    %cst_13 = arith.constant 1.000000e+00 : f32
    %19 = vector.broadcast %cst_13 : f32 to vector<2x2xf32>
    %20 = arith.addf %19, %18 : vector<2x2xf32>
    %21 = arith.divf %19, %20 : vector<2x2xf32>
    %22 = tpu.transpose %21, [1, 0] : vector<2x2xf32> -> vector<2x2xf32>
    %c0_14 = arith.constant 0 : index
    %c0_15 = arith.constant 0 : index
    %c0_16 = arith.constant 0 : index
    %23 = vector.load %arg6[%c0_14, %c0_15, %c0_16] : memref<1x2x2xf32, #tpu.memory_space<vmem>>, vector<1x2x2xf32>
    %24 = vector.shape_cast %23 : vector<1x2x2xf32> to vector<2x2xf32>
    %25 = vector.shape_cast %22 : vector<2x2xf32> to vector<1x2x2xf32>
    tpu.vector_store %arg6[%c0_14, %c0_15, %c0_16], %25 {strides = array<i32>} : memref<1x2x2xf32, #tpu.memory_space<vmem>>, vector<1x2x2xf32>,
    return
  }
  func.func @transform_0(%arg0: i32) -> (i32, i32) {
    %c0_i32 = arith.constant 0 : i32
    %c0_i32_0 = arith.constant 0 : i32
    return %arg0, %c0_i32 : i32, i32
  }
  func.func @transform_1(%arg0: i32) -> (i32, i32) {
    %c0_i32 = arith.constant 0 : i32
    %c0_i32_0 = arith.constant 0 : i32
    %c0_i32_1 = arith.constant 0 : i32
    return %c0_i32, %c0_i32_0 : i32, i32
  }
  func.func @transform_2(%arg0: i32) -> (i32, i32) {
    %c0_i32 = arith.constant 0 : i32
    %c0_i32_0 = arith.constant 0 : i32
    %c0_i32_1 = arith.constant 0 : i32
    return %c0_i32, %c0_i32_0 : i32, i32
  }
  func.func @transform_3(%arg0: i32) -> (i32, i32) {
    %c0_i32 = arith.constant 0 : i32
    %c0_i32_0 = arith.constant 0 : i32
    %c0_i32_1 = arith.constant 0 : i32
    return %c0_i32, %c0_i32_0 : i32, i32
  }
  func.func @transform_4(%arg0: i32) -> (i32, i32) {
    %c0_i32 = arith.constant 0 : i32
    %c0_i32_0 = arith.constant 0 : i32
    %c0_i32_1 = arith.constant 0 : i32
    return %c0_i32, %c0_i32_0 : i32, i32
  }
  func.func @transform_5(%arg0: i32) -> (i32, i32, i32) {
    %c0_i32 = arith.constant 0 : i32
    %c0_i32_0 = arith.constant 0 : i32
    %c0_i32_1 = arith.constant 0 : i32
    return %arg0, %c0_i32, %c0_i32_0 : i32, i32, i32
  }
}

</mosaic_0001>

<llo_original>
// kernel: tpu_custom_call.1
$region0: #{tpu_custom_call.1}
  #allocation0 [shape = 'u32[]', space=smem, size = 0x4, offset = 0x4, fixed_abs, tag = 'smem constant byte address 0x4 - core index']
  #allocation1 [shape = 'u32[72,128]{1,0:T(1,128)}', space=vmem, size = 0x9000, scoped, tag = 'internal scratch']
  %s0 = inlined_call_operand.hbm [shape: f32[8,256], index: 0, kind: input, shape index: {}]
  %s1 = inlined_call_operand.vmem [shape: f32[4,2], index: 1, kind: input, shape index: {}]
  %s2 = inlined_call_operand.vmem [shape: f32[1,2], index: 2, kind: input, shape index: {}]
  %s3 = inlined_call_operand.vmem [shape: f32[2,2], index: 3, kind: input, shape index: {}]
  %s4 = inlined_call_operand.vmem [shape: f32[1,2], index: 4, kind: input, shape index: {}]
  %s5 = inlined_call_operand.hbm [shape: f32[1,2,2], index: 5, kind: output, shape index: {}]
  %s6 = sld [smem:[#allocation0]]
  $region34: #{tpu_custom_call.1} parent=0
    _
  %s8 = ssub.s32 1, %s6
  %s9 = scalar_select 0, %s8, %s6
  $region1: #{tpu_custom_call.1} parent=0
    #allocation2 [shape = 'u8[8192]{0}', space=vmem, size = 0x2000, scoped, tag = 'input window, operand 0, single buffered']
    #allocation3 [shape = 's32[1]{0}', space=sflag, size = 0x4, scoped, tag = 'scoped memory for tpu_custom_call.1']
    #allocation4 [shape = 's32[1]{0}', space=sflag, size = 0x4, scoped, tag = 'scoped memory for tpu_custom_call.1']
    #allocation5 [shape = 'u8[1024]{0}', space=vmem, size = 0x400, scoped, tag = 'output window, operand 0, single buffered']
    %10 = vsyncpa [#allocation3], 0
    %11 = vsyncpa [#allocation4], 0
    // Predicated region
    $region2: #{tpu_custom_call.1} parent=1 // pred_check
      _
    $region3: #{tpu_custom_call.1} parent=1 // pred_check_branch
      %13 = sbr.rel (0) target = $region5
    $region4: #{tpu_custom_call.1} parent=1 // pred_region
      %15 = vsyncadd [#allocation3], 0
      %s17 = sshll.u32 %s0, 4
      %s18 = int_to_ptr.hbm [resolvable:$true] %s17
      %s19 = sshll.u32 [#allocation2], 4
      %s20 = int_to_ptr.vmem [resolvable:$true] %s19
      %22 = dma.hbm_to_vmem [thread:$0]  %s18, 256, %s20, [#allocation3]
    $region5: #{tpu_custom_call.1} parent=1 // pred_fallthru
      _
    // Predicated region
    $region6: #{tpu_custom_call.1} parent=1 // pred_check
      _
    $region7: #{tpu_custom_call.1} parent=1 // pred_check_branch
      %24 = sbr.rel (0) target = $region9
    $region8: #{tpu_custom_call.1} parent=1 // pred_region
      _
    $region9: #{tpu_custom_call.1} parent=1 // pred_fallthru
      _
    // Predicated region
    $region10: #{tpu_custom_call.1} parent=1 // pred_check
      _
    $region11: #{tpu_custom_call.1} parent=1 // pred_check_branch
      %26 = sbr.rel (0) target = $region13
    $region12: #{tpu_custom_call.1} parent=1 // pred_region
      _
    $region13: #{tpu_custom_call.1} parent=1 // pred_fallthru
      _
    // Predicated region
    $region14: #{tpu_custom_call.1} parent=1 // pred_check
      _
    $region15: #{tpu_custom_call.1} parent=1 // pred_check_branch
      %28 = sbr.rel (0) target = $region17
    $region16: #{tpu_custom_call.1} parent=1 // pred_region
      _
    $region17: #{tpu_custom_call.1} parent=1 // pred_fallthru
      _
    // Predicated region
    $region18: #{tpu_custom_call.1} parent=1 // pred_check
      _
    $region19: #{tpu_custom_call.1} parent=1 // pred_check_branch
      %30 = sbr.rel (0) target = $region21
    $region20: #{tpu_custom_call.1} parent=1 // pred_region
      _
    $region21: #{tpu_custom_call.1} parent=1 // pred_fallthru
      _
    // Predicated region
    $region22: #{tpu_custom_call.1} parent=1 // pred_check
      _
    $region23: #{tpu_custom_call.1} parent=1 // pred_check_branch
      %32 = sbr.rel (0) target = $region25
    $region24: #{tpu_custom_call.1} parent=1 // pred_region
      %34 = dma.done [#allocation3], 256
    $region25: #{tpu_custom_call.1} parent=1 // pred_fallthru
      _
    %v35 = vld [vmem:[#allocation2] sm:$0xff]
    %v36 = vld [vmem:[#allocation2 + $0x8] sm:$0xff]
    %v37 = vadd.f32 %v35, %v36
    %38 = vadd.xlane.f32.xlu0 %v37
    %v39 = vpop.xlane.xlu0 %38
    %v42 = vunpack.c.l.s4 839922192
    %v43 = vunpack.c.0.s8 %v42
    %v44 = vperm.slane %v39, %v43
    %v46 = vunpack.c.l.s4 1985246804
    %v47 = vunpack.c.0.s8 %v46
    %v48 = vperm.slane %v39, %v47
    %v51 = vmul.f32 %v44, 0.00390625
    %v52 = vmul.f32 %v48, 0.00390625
    %v53 = vld [vmem:[%s1] sm:$0xf]
    %v54 = vld [vmem:[%s2] sm:$0x1]
    %v56 = vperm.slane %v54, 0
    %60 = vst [vmem:[#allocation1] ss:$2 sm:$0xff] %v51
    %v61 = vld.sshfl [vmem:[#allocation1] sm:$0xff pattern:$0x75316420]
    %s62 = scalar_lea.vmem [#allocation1], 16
    %63 = vst [vmem:[%s62] ss:$2 sm:$0xff] %v52
    %v64 = vld.sshfl [vmem:[#allocation1 + $0x10] sm:$0xff pattern:$0x75316420]
    %65 = vset.pattern.permute.xlu0 0
    %66 = vperm.xlu0 %65, %v61
    %v67 = vpop.permute.xlu0 %66
    %68 = vset.pattern.permute.xlu0 0
    %69 = vperm.xlu0 %68, %v64
    %v70 = vpop.permute.xlu0 %69
    %v71 = vlaneseq
    %v72 = vand.u32 %v71, 127
    %v73 = vperm.slane %v67, %v72
    %v74 = vperm.slane %v70, %v72
    %vm75 = vcmask 1041409
    %v76 = vsel %vm75, %v74, %v73
    %vm77 = vcmask 31744
    %v78 = vsel %vm77, %v76, 0
    %vm80 = vcmask 1043456
    %v82 = vsel %vm80, %v53, 0
    %84 = vmatpush.msra.mxu0 0.0
    %85 = vmatpush.msra.mxu0 0.0
    %86 = vmatpush.msra.mxu0 0.0
    %87 = vmatpush.msra.mxu0 0.0
    %88 = vmatpush.msra.mxu0 0.0
    %89 = vmatpush.msra.mxu0 0.0
    %90 = vmatpush.msra.mxu0 0.0
    %91 = vmatpush.msra.mxu0 0.0
    %92 = vmatpush.msra.mxu0 0.0
    %93 = vmatpush.msra.mxu0 0.0
    %94 = vmatpush.msra.mxu0 0.0
    %95 = vmatpush.msra.mxu0 0.0
    %96 = vmatpush.msra.mxu0 0.0
    %97 = vmatpush.msra.mxu0 0.0
    %98 = vmatpush.msra.mxu0 0.0
    %99 = vmatpush.msra.mxu0 %v82
    %100 = vmatmul.f32.gmra.mxu0 %v78
    %v101 = vpop.f32.mrf.mxu0
    %v102 = vadd.f32 %v56, %v101
    %103 = vdwg.mxu0
    %v104 = vmax.f32 %v102, 0.0
    %v105 = vld [vmem:[%s3] sm:$0x3]
    %v106 = vld [vmem:[%s4] sm:$0x1]
    %v108 = vperm.slane %v106, 0
    %vm110 = vcmask 15360
    %v112 = vsel %vm110, %v104, 0
    %vm114 = vcmask 1041408
    %v116 = vsel %vm114, %v105, 0
    %118 = vmatpush.msra.mxu0 0.0
    %119 = vmatpush.msra.mxu0 0.0
    %120 = vmatpush.msra.mxu0 0.0
    %121 = vmatpush.msra.mxu0 0.0
    %122 = vmatpush.msra.mxu0 0.0
    %123 = vmatpush.msra.mxu0 0.0
    %124 = vmatpush.msra.mxu0 0.0
    %125 = vmatpush.msra.mxu0 0.0
    %126 = vmatpush.msra.mxu0 0.0
    %127 = vmatpush.msra.mxu0 0.0
    %128 = vmatpush.msra.mxu0 0.0
    %129 = vmatpush.msra.mxu0 0.0
    %130 = vmatpush.msra.mxu0 0.0
    %131 = vmatpush.msra.mxu0 0.0
    %132 = vmatpush.msra.mxu0 0.0
    %133 = vmatpush.msra.mxu0 %v116
    %134 = vmatmul.f32.gmra.mxu0 %v112
    %v135 = vpop.f32.mrf.mxu0
    %v136 = vadd.f32 %v108, %v135
    %137 = vdwg.mxu0
    %v138 = vxor.u32 %v136, 2147483648
    %v139 = vmul.f32 %v138, 1.442695
    %v140 = vpow.pop %v139
    %v141 = vadd.f32 %v140, 1.0
    %v142 = vrcp.pop %v141
    %v143 = vmul.f32 %v141, %v142
    %v144 = vsub.f32 1.0, %v143
    %v145 = vmul.f32 %v142, %v144
    %v146 = vadd.f32 %v142, %v145
    %vm147 = vweird.f32 %v141
    %vm148 = vweird.f32 %v142
    %vm149 = vmor %vm147, %vm148
    %v150 = vsel %vm149, %v142, %v146
    %v151 = vand.u32 2147483647, %v141
    %vm152 = vcmp.eq.f32.partialorder %v151, 8.507059e+37
    %v153 = vand.u32 %v141, 2147483648
    %v154 = vor.u32 1.1754944e-38, %v153
    %v155 = vsel %vm152, %v154, %v150
    %v156 = vmul.f32 1.0, %v155
    %157 = vxpose.xlu0.b32.start [1/16] %v156, 128
    %158 = vxpose.xlu0.b32.cont [2/16] 0.0, 128
    %159 = vxpose.xlu0.b32.cont [3/16] 0.0, 128
    %160 = vxpose.xlu0.b32.cont [4/16] 0.0, 128
    %161 = vxpose.xlu0.b32.cont [5/16] 0.0, 128
    %162 = vxpose.xlu0.b32.cont [6/16] 0.0, 128
    %163 = vxpose.xlu0.b32.cont [7/16] 0.0, 128
    %164 = vxpose.xlu0.b32.cont [8/16] 0.0, 128
    %165 = vxpose.xlu0.b32.cont [9/16] 0.0, 128
    %166 = vxpose.xlu0.b32.cont [10/16] 0.0, 128
    %167 = vxpose.xlu0.b32.cont [11/16] 0.0, 128
    %168 = vxpose.xlu0.b32.cont [12/16] 0.0, 128
    %169 = vxpose.xlu0.b32.cont [13/16] 0.0, 128
    %170 = vxpose.xlu0.b32.cont [14/16] 0.0, 128
    %171 = vxpose.xlu0.b32.cont [15/16] 0.0, 128
    %172 = vxpose.xlu0.b32.end [16/16] 0.0, 128
    %v173 = vpop.trf.xlu0
    %v174 = vpop.trf.xlu0
    %v175 = vpop.trf.xlu0
    %v176 = vpop.trf.xlu0
    %v177 = vpop.trf.xlu0
    %v178 = vpop.trf.xlu0
    %v179 = vpop.trf.xlu0
    %v180 = vpop.trf.xlu0
    %v181 = vpop.trf.xlu0
    %v182 = vpop.trf.xlu0
    %v183 = vpop.trf.xlu0
    %v184 = vpop.trf.xlu0
    %v185 = vpop.trf.xlu0
    %v186 = vpop.trf.xlu0
    %v187 = vpop.trf.xlu0
    %v188 = vpop.trf.xlu0
    %vm189 = vcmask 9216
    %190 = vst.msk [vmem:[#allocation5] sm:$0x3] %vm189, %v173
    // Predicated region
    $region26: #{tpu_custom_call.1} parent=1 // pred_check
      _
    $region27: #{tpu_custom_call.1} parent=1 // pred_check_branch
      %192 = sbr.rel (0) target = $region29
    $region28: #{tpu_custom_call.1} parent=1 // pred_region
      %194 = vsyncadd [#allocation4], 0
      %s196 = sshll.u32 [#allocation5], 4
      %s197 = int_to_ptr.vmem [resolvable:$true] %s196
      %s198 = sshll.u32 %s5, 4
      %s199 = int_to_ptr.hbm [resolvable:$true] %s198
      %201 = dma.vmem_to_hbm [thread:$0]  %s197, 32, %s199, [#allocation4]
    $region29: #{tpu_custom_call.1} parent=1 // pred_fallthru
      _
    // Predicated region
    $region30: #{tpu_custom_call.1} parent=1 // pred_check
      _
    $region31: #{tpu_custom_call.1} parent=1 // pred_check_branch
      %203 = sbr.rel (0) target = $region33
    $region32: #{tpu_custom_call.1} parent=1 // pred_region
      %205 = dma.done [#allocation4], 32
    $region33: #{tpu_custom_call.1} parent=1 // pred_fallthru
      _
    %206 = vsyncpa [#allocation3], 1
    %207 = vsyncpa [#allocation4], 1

</llo_original>
